<compile_context>
chip_gen: v5e
topology: v5e:2x2
jax: 0.10.0
libtpu: 0.0.40
codegen_flags: <defaults>
</compile_context>

<pallas_src>
import functools
import math

import jax
import jax.numpy as jnp
from jax.experimental import pallas as pl
from jax.experimental.pallas import tpu as pltpu


def _text_tokenizer_kernel(x_ref, w_ref, o_ref, *, conv_k, conv_stride,
                           conv_pad, l_conv, pool_k, pool_stride, pool_pad,
                           l_pool, max_pool):
    """One batch tile per grid step.

    x_ref: (Bt, S, E)        compute-dtype (bf16) sequence block (unpadded)
    w_ref: (K*E, C)          conv weight, reshaped from torch (C,1,K,E)
    o_ref: (Bt, L_out, C)    output block
    """
    bt, _, e = x_ref.shape
    c = o_ref.shape[-1]

    # ---- Conv2d(1, C, (K, E), stride=(s,1), padding=(p,0), bias=False) ----
    # Zero-pad the sequence in registers, build the (Bt*l_conv, K*E) im2col
    # tile with K shifted slices, and issue one bf16 MXU matmul with f32 acc.
    xv = x_ref[...]
    if conv_pad > 0:
        zpad = jnp.zeros((bt, conv_pad, e), xv.dtype)
        xv = jnp.concatenate([zpad, xv, zpad], axis=1)
    span = (l_conv - 1) * conv_stride + 1
    # conv_stride == 1 (common case) uses plain contiguous slices.
    taps = [xv[:, k:k + span:conv_stride, :] for k in range(conv_k)]
    patches = taps[0] if conv_k == 1 else jnp.concatenate(taps, axis=-1)
    patches = patches.reshape(bt * l_conv, conv_k * e)
    conv = jnp.dot(patches, w_ref[...], preferred_element_type=jnp.float32)
    conv = conv.reshape(bt, l_conv, c)

    if not max_pool:
        o_ref[...] = conv.astype(o_ref.dtype)
        return

    # ---- MaxPool2d((pool_k,1),(pool_stride,1),(pool_pad,0)) over sequence ----
    # PyTorch max-pool padding is implicit -inf padding.  Everything stays in
    # registers.  A single concatenate applies left/right -inf padding
    # (right side may be over-padded so the reshape-group trick below covers
    # every window with contiguous slices only).
    if pool_stride == 1:
        need = l_pool + pool_k - 1
    elif pool_k >= pool_stride:
        need = (pool_k - pool_stride) + l_pool * pool_stride
    else:
        need = (l_pool - 1) * pool_stride + pool_k
    plen = l_conv + 2 * pool_pad
    left = pool_pad
    right = pool_pad + max(0, need - plen)
    if left > 0 or right > 0:
        pieces = []
        if left > 0:
            pieces.append(jnp.full((bt, left, c), -jnp.inf, jnp.float32))
        pieces.append(conv)
        if right > 0:
            pieces.append(jnp.full((bt, right, c), -jnp.inf, jnp.float32))
        convp = jnp.concatenate(pieces, axis=1)
    else:
        convp = conv

    if pool_stride == 1:
        pooled = convp[:, 0:l_pool, :]
        for k in range(1, pool_k):
            pooled = jnp.maximum(pooled, convp[:, k:k + l_pool, :])
    elif pool_k >= pool_stride:
        # Strided windows without strided loads: contiguous slice at offset o,
        # reshape to (Bt, l_pool, pool_stride, C), max over the stride group;
        # the union over offsets 0..pool_k-pool_stride covers each full
        # pooling window exactly.
        pooled = None
        for o in range(pool_k - pool_stride + 1):
            grp = convp[:, o:o + l_pool * pool_stride, :]
            grp = grp.reshape(bt, l_pool, pool_stride, c)
            gmax = jnp.max(grp, axis=2)
            pooled = gmax if pooled is None else jnp.maximum(pooled, gmax)
    else:
        # pool_k < pool_stride (gapped windows): fall back to strided slices.
        pooled = None
        for k in range(pool_k):
            win = convp[:, k:k + (l_pool - 1) * pool_stride + 1:pool_stride, :]
            pooled = win if pooled is None else jnp.maximum(pooled, win)

    o_ref[...] = pooled.astype(o_ref.dtype)


def text_tokenizer_forward(x, w, *, kernel_size, stride, padding,
                           pooling_kernel_size=3, pooling_stride=2,
                           pooling_padding=1, max_pool=True, mask=None,
                           compute_dtype=jnp.bfloat16, batch_tile=None):
    """Pallas equivalent of TextTokenizer.forward(x, mask=None) -> (out, mask).

    x: (B, S, E) float32;  w: (K, E, C) — the torch Conv2d weight (C,1,K,E)
    transposed to (K, E, C).
    """
    # TODO(synk): forward_mask (conv1d + max_pool1d on the boolean mask) is
    # not implemented; only the mask=None branch is supported.
    assert mask is None
    B, S, E = x.shape
    K, E_w, C = w.shape
    assert K == kernel_size and E_w == E

    l_conv = (S + 2 * padding - kernel_size) // stride + 1
    if max_pool:
        l_out = (l_conv + 2 * pooling_padding - pooling_kernel_size) // pooling_stride + 1
    else:
        l_out = l_conv

    out_dtype = x.dtype
    in_size = jnp.dtype(compute_dtype).itemsize
    out_size = jnp.dtype(out_dtype).itemsize

    # --- Batch tiling: fold Bt batch rows per grid step so the MXU sees
    #     M = Bt*l_conv rows, while keeping the double-buffered block
    #     footprint well under the default scoped-VMEM budget (re-derived per
    #     call, so it also fits v7x's smaller VMEM). ---
    if batch_tile is None:
        per_b_bytes = 2 * S * E * in_size + 2 * l_out * C * out_size
        bt_vmem = max(1, (8 * 1024 * 1024) // max(per_b_bytes, 1))
        bt_rows = max(1, -(-512 // max(l_conv, 1)))     # target ~512 MXU rows
        bt_cap = max(1, min(B, bt_vmem, bt_rows))
        bt = max(d for d in range(1, bt_cap + 1) if B % d == 0)
        if bt * 4 <= bt_cap:        # largest divisor far below target: pad batch
            bt = bt_cap
    else:
        bt = batch_tile
    B_pad = -(-B // bt) * bt

    xc = x.astype(compute_dtype)
    if B_pad != B:
        xc = jnp.pad(xc, ((0, B_pad - B), (0, 0), (0, 0)))
    # (K, E, C) -> (K*E, C); row index k*E + e matches the im2col concat order.
    wc = w.reshape(K * E, C).astype(compute_dtype)

    kernel = functools.partial(
        _text_tokenizer_kernel,
        conv_k=kernel_size, conv_stride=stride, conv_pad=padding,
        l_conv=l_conv, pool_k=pooling_kernel_size, pool_stride=pooling_stride,
        pool_pad=pooling_padding, l_pool=l_out, max_pool=max_pool)

    flops = 2 * B_pad * l_conv * K * E * C
    bytes_accessed = (xc.size * in_size + wc.size * in_size
                      + B_pad * l_out * C * out_size)

    out = pl.pallas_call(
        kernel,
        out_shape=jax.ShapeDtypeStruct((B_pad, l_out, C), out_dtype),
        grid_spec=pltpu.PrefetchScalarGridSpec(
            num_scalar_prefetch=0,
            grid=(B_pad // bt,),
            in_specs=[
                pl.BlockSpec((bt, S, E), lambda b: (b, 0, 0)),
                pl.BlockSpec((K * E, C), lambda b: (0, 0)),
            ],
            out_specs=pl.BlockSpec((bt, l_out, C), lambda b: (b, 0, 0)),
        ),
        compiler_params=pltpu.CompilerParams(
            dimension_semantics=("parallel",)),
        cost_estimate=pl.CostEstimate(flops=flops, transcendentals=0,
                                      bytes_accessed=bytes_accessed),
    )(xc, wc)
    if B_pad != B:
        out = out[:B]
    return out, mask


def _reference_forward(x, w, *, kernel_size, stride, padding,
                       pooling_kernel_size, pooling_stride, pooling_padding,
                       max_pool):
    """Pure-JAX reference mirroring the PyTorch semantics."""
    B, S, E = x.shape
    K, _, C = w.shape
    l_conv = (S + 2 * padding - kernel_size) // stride + 1
    x_pad = jnp.pad(x, ((0, 0), (padding, padding), (0, 0)))
    windows = jnp.stack(
        [jax.lax.slice(x_pad, (0, k, 0), (B, k + (l_conv - 1) * stride + 1, E),
                       (1, stride, 1)) for k in range(K)], axis=0)
    conv = jnp.einsum('kbte,kec->btc', windows, w,
                      precision=jax.lax.Precision.HIGHEST)
    if not max_pool:
        return conv
    l_pool = (l_conv + 2 * pooling_padding - pooling_kernel_size) // pooling_stride + 1
    conv_p = jnp.pad(conv, ((0, 0), (pooling_padding, pooling_padding), (0, 0)),
                     constant_values=-jnp.inf)
    pooled = None
    for k in range(pooling_kernel_size):
        win = conv_p[:, k::pooling_stride, :][:, :l_pool, :]
        pooled = win if pooled is None else jnp.maximum(pooled, win)
    return pooled


if __name__ == "__main__":
    # Module config (small but faithful): Conv2d(1, C, (3, E), stride=(1,1),
    # padding=(1,0), bias=False) + MaxPool2d((3,1), (2,1), (1,0)).
    B, S, E, C = 2, 16, 32, 128
    kernel_size, stride, padding = 3, 1, 1
    pooling_kernel_size, pooling_stride, pooling_padding = 3, 2, 1

    key = jax.random.PRNGKey(0)
    kx, kw = jax.random.split(key)
    x = jax.random.normal(kx, (B, S, E), dtype=jnp.float32)
    # kaiming_normal_ (fan_in = 1 * K * E) init; weight laid out as (K, E, C).
    fan_in = 1 * kernel_size * E
    w = jax.random.normal(kw, (kernel_size, E, C), dtype=jnp.float32) * math.sqrt(2.0 / fan_in)

    out, mask = text_tokenizer_forward(
        x, w, kernel_size=kernel_size, stride=stride, padding=padding,
        pooling_kernel_size=pooling_kernel_size, pooling_stride=pooling_stride,
        pooling_padding=pooling_padding, max_pool=True)
    out = jax.block_until_ready(out)

    # Reference with the same bf16-rounded operands the kernel feeds the MXU
    # (accumulation is f32 in both).
    x32 = x.astype(jnp.bfloat16).astype(jnp.float32)
    w32 = w.astype(jnp.bfloat16).astype(jnp.float32)
    ref = _reference_forward(
        x32, w32, kernel_size=kernel_size, stride=stride, padding=padding,
        pooling_kernel_size=pooling_kernel_size, pooling_stride=pooling_stride,
        pooling_padding=pooling_padding, max_pool=True)
    assert out.shape == ref.shape, (out.shape, ref.shape)
    assert jnp.allclose(out, ref, rtol=1e-2, atol=1e-2), \
        float(jnp.max(jnp.abs(out - ref)))

    # Also exercise the max_pool=False (nn.Identity) branch.
    out2, _ = text_tokenizer_forward(
        x, w, kernel_size=kernel_size, stride=stride, padding=padding,
        max_pool=False)
    out2 = jax.block_until_ready(out2)
    ref2 = _reference_forward(
        x32, w32, kernel_size=kernel_size, stride=stride, padding=padding,
        pooling_kernel_size=pooling_kernel_size, pooling_stride=pooling_stride,
        pooling_padding=pooling_padding, max_pool=False)
    assert out2.shape == ref2.shape, (out2.shape, ref2.shape)
    assert jnp.allclose(out2, ref2, rtol=1e-2, atol=1e-2), \
        float(jnp.max(jnp.abs(out2 - ref2)))

    print("KERNEL_OK")
</pallas_src>

<mosaic_0001>
module attributes {stable_mosaic.version = 11 : i64} {
  func.func @_text_tokenizer_kernel(%arg0: i32, %arg1: memref<2x16x32xbf16, #tpu.memory_space<vmem>>, %arg2: memref<96x128xbf16, #tpu.memory_space<vmem>>, %arg3: memref<2x8x128xf32, #tpu.memory_space<vmem>>) attributes {dimension_semantics = [#tpu.dimension_semantics<parallel>], iteration_bounds = array<i64: 1>, scalar_prefetch = 0 : i64, scratch_operands = 0 : i64, tpu.core_type = #tpu.core_type<tc>, window_params = [{transform_indices = @transform_0, window_bounds = array<i64: 2, 16, 32>}, {pipeline_mode = #tpu.pipeline_mode<synchronous>, transform_indices = @transform_1, window_bounds = array<i64: 96, 128>}, {transform_indices = @transform_2, window_bounds = array<i64: 2, 8, 128>}]} {
    %c0 = arith.constant 0 : index
    %c0_0 = arith.constant 0 : index
    %c0_1 = arith.constant 0 : index
    %0 = vector.load %arg1[%c0, %c0_0, %c0_1] : memref<2x16x32xbf16, #tpu.memory_space<vmem>>, vector<2x16x32xbf16>
    %cst = arith.constant 0.000000e+00 : bf16
    %1 = vector.broadcast %cst : bf16 to vector<2x1x32xbf16>
    %2 = tpu.concatenate %1, %0, %1 in 1 : vector<2x1x32xbf16>, vector<2x16x32xbf16>, vector<2x1x32xbf16> -> vector<2x18x32xbf16>
    %3 = vector.extract_strided_slice %2 {offsets = [0, 0, 0], sizes = [2, 16, 32], strides = [1, 1, 1]} : vector<2x18x32xbf16> to vector<2x16x32xbf16>
    %4 = vector.extract_strided_slice %2 {offsets = [0, 1, 0], sizes = [2, 16, 32], strides = [1, 1, 1]} : vector<2x18x32xbf16> to vector<2x16x32xbf16>
    %5 = vector.extract_strided_slice %2 {offsets = [0, 2, 0], sizes = [2, 16, 32], strides = [1, 1, 1]} : vector<2x18x32xbf16> to vector<2x16x32xbf16>
    %6 = tpu.concatenate %3, %4, %5 in 2 : vector<2x16x32xbf16>, vector<2x16x32xbf16>, vector<2x16x32xbf16> -> vector<2x16x96xbf16>
    %7 = vector.shape_cast %6 : vector<2x16x96xbf16> to vector<32x96xbf16>
    %c0_2 = arith.constant 0 : index
    %c0_3 = arith.constant 0 : index
    %8 = vector.load %arg2[%c0_2, %c0_3] : memref<96x128xbf16, #tpu.memory_space<vmem>>, vector<96x128xbf16>
    %cst_4 = arith.constant dense<0.000000e+00> : vector<32x128xf32>
    %9 = tpu.matmul %7, %8, %cst_4 {dimension_numbers = #tpu.dot_dimension_numbers<[1], [0], [0], [1], [0, 0, 1, 1], [], []>} : vector<32x96xbf16>, vector<96x128xbf16>, vector<32x128xf32> -> vector<32x128xf32>
    %10 = vector.shape_cast %9 : vector<32x128xf32> to vector<2x16x128xf32>
    %cst_5 = arith.constant 0xFF800000 : f32
    %11 = vector.broadcast %cst_5 : f32 to vector<2x1x128xf32>
    %cst_6 = arith.constant 0xFF800000 : f32
    %12 = vector.broadcast %cst_6 : f32 to vector<2x1x128xf32>
    %13 = tpu.concatenate %11, %10, %12 in 1 : vector<2x1x128xf32>, vector<2x16x128xf32>, vector<2x1x128xf32> -> vector<2x18x128xf32>
    %14 = vector.extract_strided_slice %13 {offsets = [0, 0, 0], sizes = [2, 16, 128], strides = [1, 1, 1]} : vector<2x18x128xf32> to vector<2x16x128xf32>
    %15 = vector.shape_cast %14 : vector<2x16x128xf32> to vector<2x8x2x128xf32>
    %cst_7 = arith.constant dense<0xFF800000> : vector<2x8x128xf32>
    %16 = vector.multi_reduction <maximumf>, %15, %cst_7 [2] : vector<2x8x2x128xf32> to vector<2x8x128xf32>
    %17 = vector.extract_strided_slice %13 {offsets = [0, 1, 0], sizes = [2, 16, 128], strides = [1, 1, 1]} : vector<2x18x128xf32> to vector<2x16x128xf32>
    %18 = vector.shape_cast %17 : vector<2x16x128xf32> to vector<2x8x2x128xf32>
    %cst_8 = arith.constant dense<0xFF800000> : vector<2x8x128xf32>
    %19 = vector.multi_reduction <maximumf>, %18, %cst_8 [2] : vector<2x8x2x128xf32> to vector<2x8x128xf32>
    %20 = arith.maximumf %16, %19 : vector<2x8x128xf32>
    %c0_9 = arith.constant 0 : index
    %c0_10 = arith.constant 0 : index
    %c0_11 = arith.constant 0 : index
    %21 = vector.load %arg3[%c0_9, %c0_10, %c0_11] : memref<2x8x128xf32, #tpu.memory_space<vmem>>, vector<2x8x128xf32>
    tpu.vector_store %arg3[%c0_9, %c0_10, %c0_11], %20 {strides = array<i32>} : memref<2x8x128xf32, #tpu.memory_space<vmem>>, vector<2x8x128xf32>,
    return
  }
  func.func @transform_0(%arg0: i32) -> (i32, i32, i32) {
    %c0_i32 = arith.constant 0 : i32
    %c0_i32_0 = arith.constant 0 : i32
    %c0_i32_1 = arith.constant 0 : i32
    return %arg0, %c0_i32, %c0_i32_0 : i32, i32, i32
  }
  func.func @transform_1(%arg0: i32) -> (i32, i32) {
    %c0_i32 = arith.constant 0 : i32
    %c0_i32_0 = arith.constant 0 : i32
    %c0_i32_1 = arith.constant 0 : i32
    return %c0_i32, %c0_i32_0 : i32, i32
  }
  func.func @transform_2(%arg0: i32) -> (i32, i32, i32) {
    %c0_i32 = arith.constant 0 : i32
    %c0_i32_0 = arith.constant 0 : i32
    %c0_i32_1 = arith.constant 0 : i32
    return %arg0, %c0_i32, %c0_i32_0 : i32, i32, i32
  }
}

</mosaic_0001>

<llo_original>
// kernel: tpu_custom_call.1
$region0: #{tpu_custom_call.1}
  #allocation0 [shape = 'u32[]', space=smem, size = 0x4, offset = 0x4, fixed_abs, tag = 'smem constant byte address 0x4 - core index']
  #allocation1 [shape = 'u32[72,128]{1,0:T(1,128)}', space=vmem, size = 0x9000, scoped, tag = 'internal scratch']
  %s0 = inlined_call_operand.hbm [shape: bf16[2,16,32], index: 0, kind: input, shape index: {}]
  %s1 = inlined_call_operand.hbm [shape: bf16[96,128], index: 1, kind: input, shape index: {}]
  %s2 = inlined_call_operand.hbm [shape: f32[2,8,128], index: 2, kind: output, shape index: {}]
  %s3 = sld [smem:[#allocation0]]
  $region26: #{tpu_custom_call.1} parent=0
    _
  %s5 = ssub.s32 1, %s3
  %s6 = scalar_select 0, %s5, %s3
  $region1: #{tpu_custom_call.1} parent=0
    #allocation2 [shape = 'u8[8192]{0}', space=vmem, size = 0x2000, scoped, tag = 'input window, operand 0, single buffered']
    #allocation3 [shape = 's32[1]{0}', space=sflag, size = 0x4, scoped, tag = 'scoped memory for tpu_custom_call.1']
    #allocation4 [shape = 's32[1]{0}', space=sflag, size = 0x4, scoped, tag = 'scoped memory for tpu_custom_call.1']
    #allocation5 [shape = 'u8[24576]{0}', space=vmem, size = 0x6000, scoped, tag = 'input window, operand 1, single buffered']
    #allocation6 [shape = 's32[1]{0}', space=sflag, size = 0x4, scoped, tag = 'scoped memory for tpu_custom_call.1']
    #allocation7 [shape = 'u8[8192]{0}', space=vmem, size = 0x2000, scoped, tag = 'output window, operand 0, single buffered']
    %7 = vsyncpa [#allocation3], 0
    %8 = vsyncpa [#allocation6], 0
    %9 = vsyncpa [#allocation4], 0
    // Predicated region
    $region2: #{tpu_custom_call.1} parent=1 // pred_check
      _
    $region3: #{tpu_custom_call.1} parent=1 // pred_check_branch
      %11 = sbr.rel (0) target = $region5
    $region4: #{tpu_custom_call.1} parent=1 // pred_region
      %13 = vsyncadd [#allocation3], 0
      %s14 = sshll.u32 %s0, 4
      %s15 = int_to_ptr.hbm [resolvable:$true] %s14
      %s16 = sshll.u32 [#allocation2], 4
      %s17 = int_to_ptr.vmem [resolvable:$true] %s16
      %22 = dma.hbm_to_vmem [thread:$0]  %s15, 256, %s17, [#allocation3], 64, 64, 4
    $region5: #{tpu_custom_call.1} parent=1 // pred_fallthru
      _
    // Predicated region
    $region6: #{tpu_custom_call.1} parent=1 // pred_check
      _
    $region7: #{tpu_custom_call.1} parent=1 // pred_check_branch
      %24 = sbr.rel (0) target = $region9
    $region8: #{tpu_custom_call.1} parent=1 // pred_region
      %26 = vsyncadd [#allocation6], 0
      %s27 = sshll.u32 %s1, 4
      %s28 = int_to_ptr.hbm [resolvable:$true] %s27
      %s29 = sshll.u32 [#allocation5], 4
      %s30 = int_to_ptr.vmem [resolvable:$true] %s29
      %35 = dma.hbm_to_vmem [thread:$0]  %s28, 768, %s30, [#allocation6], 64, 64, 4
    $region9: #{tpu_custom_call.1} parent=1 // pred_fallthru
      _
    // Predicated region
    $region10: #{tpu_custom_call.1} parent=1 // pred_check
      _
    $region11: #{tpu_custom_call.1} parent=1 // pred_check_branch
      %37 = sbr.rel (0) target = $region13
    $region12: #{tpu_custom_call.1} parent=1 // pred_region
      %39 = dma.done [#allocation3], 256
    $region13: #{tpu_custom_call.1} parent=1 // pred_fallthru
      _
    // Predicated region
    $region14: #{tpu_custom_call.1} parent=1 // pred_check
      _
    $region15: #{tpu_custom_call.1} parent=1 // pred_check_branch
      %41 = sbr.rel (0) target = $region17
    $region16: #{tpu_custom_call.1} parent=1 // pred_region
      %43 = dma.done [#allocation6], 768
    $region17: #{tpu_custom_call.1} parent=1 // pred_fallthru
      _
    %v45 = vld [vmem:[#allocation2] sm:$0xf]
    %v46 = vld [vmem:[#allocation2 + $0x4] sm:$0xf]
    %v47 = vld [vmem:[#allocation2 + $0x8] sm:$0xf]
    %v48 = vld [vmem:[#allocation2 + $0xc] sm:$0xf]
    %v53 = vunpack.c.l.b16 %v45
    %v54 = vunpack.c.l.b16 %v46
    %v55 = vunpack.c.l.b16 %v47
    %v56 = vunpack.c.l.b16 %v48
    %v57 = vpack.c.b16 %v54, %v53
    %v58 = vpack.c.b16 %v56, %v55
    %v60 = vshrl.u32 %v57, 16
    %v62 = vrot.slane %v60, 7
    %v63 = vshll.u32 %v57, 16
    %v65 = vor.u32 %v62, %v63
    %v67 = vshrl.u32 %v58, 16
    %v69 = vrot.slane %v67, 7
    %v70 = vshll.u32 %v58, 16
    %v72 = vor.u32 %v69, %v70
    %vm77 = vcmask 1040384
    %vm78 = vsmask.f32 256
    %vm79 = vmand %vm77, %vm78
    %v80 = vsel %vm79, 0, %v65
    %v81 = vsel %vm79, 0, %v72
    %v82 = vsel %vm79, %v62, 0
    %v83 = vsel %vm79, %v69, 0
    %vm84 = vsmask.f32 7424
    %v86 = vshrl.u32 %v80, 16
    %v88 = vshll.u32 %v80, 16
    %v90 = vrot.slane %v88, 1
    %v91 = vor.u32 %v86, %v90
    %v93 = vshll.u32 %v82, 16
    %v95 = vrot.slane %v93, 1
    %v96 = vsel %vm84, %v91, %v95
    %v98 = vshrl.u32 %v81, 16
    %v100 = vshll.u32 %v81, 16
    %v102 = vrot.slane %v100, 1
    %v103 = vor.u32 %v98, %v102
    %v105 = vshll.u32 %v83, 16
    %v107 = vrot.slane %v105, 1
    %v108 = vsel %vm84, %v103, %v107
    %109 = vrot.lane.b32.xlu0 %v96, 32
    %v110 = vpop.permute.xlu0 %109
    %111 = vrot.lane.b32.xlu0 %v108, 32
    %v112 = vpop.permute.xlu0 %111
    %vm117 = vcmask 1046528
    %v118 = vrot.slane %v80, 1
    %v119 = vrot.slane %v82, 1
    %v120 = vsel %vm117, %v118, %v119
    %v121 = vrot.slane %v81, 1
    %v122 = vrot.slane %v83, 1
    %v123 = vsel %vm117, %v121, %v122
    %124 = vrot.lane.b32.xlu0 %v120, 64
    %v125 = vpop.permute.xlu0 %124
    %126 = vrot.lane.b32.xlu0 %v123, 64
    %v127 = vpop.permute.xlu0 %126
    %vm128 = vcmask 261120
    %v130 = vsel %vm128, %v80, %v110
    %v132 = vsel %vm128, %v81, %v112
    %vm133 = vcmask 523264
    %v135 = vsel %vm133, %v130, %v125
    %v137 = vsel %vm133, %v132, %v127
    %v138 = vld [vmem:[#allocation5] sm:$0xf]
    %v139 = vld [vmem:[#allocation5 + $0x4] sm:$0xf]
    %v140 = vld [vmem:[#allocation5 + $0x8] sm:$0xf]
    %v141 = vld [vmem:[#allocation5 + $0xc] sm:$0xf]
    %v142 = vld [vmem:[#allocation5 + $0x10] sm:$0xf]
    %v143 = vld [vmem:[#allocation5 + $0x14] sm:$0xf]
    %v144 = vld [vmem:[#allocation5 + $0x18] sm:$0xf]
    %v145 = vld [vmem:[#allocation5 + $0x1c] sm:$0xf]
    %v146 = vld [vmem:[#allocation5 + $0x20] sm:$0xf]
    %v147 = vld [vmem:[#allocation5 + $0x24] sm:$0xf]
    %v148 = vld [vmem:[#allocation5 + $0x28] sm:$0xf]
    %v149 = vld [vmem:[#allocation5 + $0x2c] sm:$0xf]
    %v162 = vunpack.c.l.b16 %v138
    %v163 = vunpack.c.l.b16 %v139
    %v164 = vunpack.c.l.b16 %v140
    %v165 = vunpack.c.l.b16 %v141
    %v166 = vunpack.c.l.b16 %v142
    %v167 = vunpack.c.l.b16 %v143
    %v168 = vunpack.c.l.b16 %v144
    %v169 = vunpack.c.l.b16 %v145
    %v170 = vunpack.c.l.b16 %v146
    %v171 = vunpack.c.l.b16 %v147
    %v172 = vunpack.c.l.b16 %v148
    %v173 = vunpack.c.l.b16 %v149
    %v174 = vpack.c.b16 %v163, %v162
    %v175 = vpack.c.b16 %v165, %v164
    %v176 = vpack.c.b16 %v167, %v166
    %v177 = vpack.c.b16 %v169, %v168
    %v178 = vpack.c.b16 %v171, %v170
    %v179 = vpack.c.b16 %v173, %v172
    %vm186 = vcmask 785408
    %v187 = vsel %vm186, %v135, 0
    %v189 = vsel %vm186, %v137, 0
    %191 = vmatpush.bf16.msra.mxu0 0
    %192 = vmatpush.bf16.msra.mxu0 0
    %193 = vmatpush.bf16.msra.mxu0 %v179
    %194 = vmatpush.bf16.msra.mxu0 %v178
    %195 = vmatpush.bf16.msra.mxu0 %v177
    %196 = vmatpush.bf16.msra.mxu0 %v176
    %197 = vmatpush.bf16.msra.mxu0 %v175
    %198 = vmatpush.bf16.msra.mxu0 %v174
    %199 = vmatmul.bf16.gmra.mxu0 %v187
    %v200 = vpop.f32.mrf.mxu0
    %v201 = vadd.f32 0.0, %v200
    %v202 = vpop.f32.mrf.mxu0
    %v203 = vadd.f32 0.0, %v202
    %204 = vmatmul.bf16.gmra.mxu0 %v189
    %v205 = vpop.f32.mrf.mxu0
    %v206 = vadd.f32 0.0, %v205
    %v207 = vpop.f32.mrf.mxu0
    %v208 = vadd.f32 0.0, %v207
    %209 = vdwg.mxu0
    %vm214 = vcmask 1040384
    %v215 = vrot.slane %v201, 7
    %v216 = vrot.slane %v203, 7
    %v217 = vsel %vm214, %v215, %v216
    %v218 = vrot.slane %v206, 7
    %v219 = vrot.slane %v208, 7
    %v220 = vsel %vm214, %v218, %v219
    %v227 = vsel %vm214, -inf, %v215
    %v228 = vsel %vm214, -inf, %v218
    %v229 = vsel %vm214, %v216, -inf
    %v230 = vsel %vm214, %v219, -inf
    %v233 = vrot.slane %v227, 2
    %v234 = vrot.slane %v227, 4
    %v235 = vrot.slane %v227, 6
    %v236 = vrot.slane %v217, 2
    %v237 = vrot.slane %v217, 4
    %v238 = vrot.slane %v217, 6
    %v239 = vrot.slane %v228, 2
    %v240 = vrot.slane %v228, 4
    %v241 = vrot.slane %v228, 6
    %v242 = vrot.slane %v220, 2
    %v243 = vrot.slane %v220, 4
    %v244 = vrot.slane %v220, 6
    %vm257 = vcmask 1041408
    %v258 = vsel %vm257, %v227, -inf
    %v259 = vrot.slane %v258, 4
    %v260 = vmax.f32 %v258, %v259
    %v261 = vrot.slane %v260, 2
    %v262 = vmax.f32 %v260, %v261
    %v263 = vrot.slane %v262, 1
    %v264 = vmax.f32 %v262, %v263
    %v265 = vsel %vm257, %v233, -inf
    %v266 = vrot.slane %v265, 4
    %v267 = vmax.f32 %v265, %v266
    %v268 = vrot.slane %v267, 2
    %v269 = vmax.f32 %v267, %v268
    %v270 = vrot.slane %v269, 1
    %v271 = vmax.f32 %v269, %v270
    %v272 = vsel %vm257, %v234, -inf
    %v273 = vrot.slane %v272, 4
    %v274 = vmax.f32 %v272, %v273
    %v275 = vrot.slane %v274, 2
    %v276 = vmax.f32 %v274, %v275
    %v277 = vrot.slane %v276, 1
    %v278 = vmax.f32 %v276, %v277
    %v279 = vsel %vm257, %v235, -inf
    %v280 = vrot.slane %v279, 4
    %v281 = vmax.f32 %v279, %v280
    %v282 = vrot.slane %v281, 2
    %v283 = vmax.f32 %v281, %v282
    %v284 = vrot.slane %v283, 1
    %v285 = vmax.f32 %v283, %v284
    %v286 = vsel %vm257, %v217, -inf
    %v287 = vrot.slane %v286, 4
    %v288 = vmax.f32 %v286, %v287
    %v289 = vrot.slane %v288, 2
    %v290 = vmax.f32 %v288, %v289
    %v291 = vrot.slane %v290, 1
    %v292 = vmax.f32 %v290, %v291
    %v293 = vsel %vm257, %v236, -inf
    %v294 = vrot.slane %v293, 4
    %v295 = vmax.f32 %v293, %v294
    %v296 = vrot.slane %v295, 2
    %v297 = vmax.f32 %v295, %v296
    %v298 = vrot.slane %v297, 1
    %v299 = vmax.f32 %v297, %v298
    %v300 = vsel %vm257, %v237, -inf
    %v301 = vrot.slane %v300, 4
    %v302 = vmax.f32 %v300, %v301
    %v303 = vrot.slane %v302, 2
    %v304 = vmax.f32 %v302, %v303
    %v305 = vrot.slane %v304, 1
    %v306 = vmax.f32 %v304, %v305
    %v307 = vsel %vm257, %v238, -inf
    %v308 = vrot.slane %v307, 4
    %v309 = vmax.f32 %v307, %v308
    %v310 = vrot.slane %v309, 2
    %v311 = vmax.f32 %v309, %v310
    %v312 = vrot.slane %v311, 1
    %v313 = vmax.f32 %v311, %v312
    %v314 = vsel %vm257, %v228, -inf
    %v315 = vrot.slane %v314, 4
    %v316 = vmax.f32 %v314, %v315
    %v317 = vrot.slane %v316, 2
    %v318 = vmax.f32 %v316, %v317
    %v319 = vrot.slane %v318, 1
    %v320 = vmax.f32 %v318, %v319
    %v321 = vsel %vm257, %v239, -inf
    %v322 = vrot.slane %v321, 4
    %v323 = vmax.f32 %v321, %v322
    %v324 = vrot.slane %v323, 2
    %v325 = vmax.f32 %v323, %v324
    %v326 = vrot.slane %v325, 1
    %v327 = vmax.f32 %v325, %v326
    %v328 = vsel %vm257, %v240, -inf
    %v329 = vrot.slane %v328, 4
    %v330 = vmax.f32 %v328, %v329
    %v331 = vrot.slane %v330, 2
    %v332 = vmax.f32 %v330, %v331
    %v333 = vrot.slane %v332, 1
    %v334 = vmax.f32 %v332, %v333
    %v335 = vsel %vm257, %v241, -inf
    %v336 = vrot.slane %v335, 4
    %v337 = vmax.f32 %v335, %v336
    %v338 = vrot.slane %v337, 2
    %v339 = vmax.f32 %v337, %v338
    %v340 = vrot.slane %v339, 1
    %v341 = vmax.f32 %v339, %v340
    %v342 = vsel %vm257, %v220, -inf
    %v343 = vrot.slane %v342, 4
    %v344 = vmax.f32 %v342, %v343
    %v345 = vrot.slane %v344, 2
    %v346 = vmax.f32 %v344, %v345
    %v347 = vrot.slane %v346, 1
    %v348 = vmax.f32 %v346, %v347
    %v349 = vsel %vm257, %v242, -inf
    %v350 = vrot.slane %v349, 4
    %v351 = vmax.f32 %v349, %v350
    %v352 = vrot.slane %v351, 2
    %v353 = vmax.f32 %v351, %v352
    %v354 = vrot.slane %v353, 1
    %v355 = vmax.f32 %v353, %v354
    %v356 = vsel %vm257, %v243, -inf
    %v357 = vrot.slane %v356, 4
    %v358 = vmax.f32 %v356, %v357
    %v359 = vrot.slane %v358, 2
    %v360 = vmax.f32 %v358, %v359
    %v361 = vrot.slane %v360, 1
    %v362 = vmax.f32 %v360, %v361
    %v363 = vsel %vm257, %v244, -inf
    %v364 = vrot.slane %v363, 4
    %v365 = vmax.f32 %v363, %v364
    %v366 = vrot.slane %v365, 2
    %v367 = vmax.f32 %v365, %v366
    %v368 = vrot.slane %v367, 1
    %v369 = vmax.f32 %v367, %v368
    %vm372 = vcmask 1042434
    %vm373 = vmor %vm214, %vm372
    %vm374 = vcmask 1044484
    %vm375 = vmor %vm373, %vm374
    %vm376 = vcmask 1046534
    %vm377 = vmor %vm375, %vm376
    %v378 = vrot.slane %v227, 7
    %v379 = vrot.slane %v378, 2
    %v380 = vrot.slane %v233, 7
    %v381 = vsel %vm377, %v379, %v380
    %v382 = vrot.slane %v380, 2
    %v383 = vrot.slane %v234, 7
    %v384 = vsel %vm377, %v382, %v383
    %v385 = vrot.slane %v383, 2
    %v386 = vrot.slane %v235, 7
    %v387 = vsel %vm377, %v385, %v386
    %v388 = vrot.slane %v386, 2
    %v389 = vrot.slane %v217, 7
    %v390 = vsel %vm377, %v388, %v389
    %v391 = vrot.slane %v389, 2
    %v392 = vrot.slane %v236, 7
    %v393 = vsel %vm377, %v391, %v392
    %v394 = vrot.slane %v392, 2
    %v395 = vrot.slane %v237, 7
    %v396 = vsel %vm377, %v394, %v395
    %v397 = vrot.slane %v395, 2
    %v398 = vrot.slane %v238, 7
    %v399 = vsel %vm377, %v397, %v398
    %v400 = vrot.slane %v398, 2
    %v401 = vrot.slane %v229, 7
    %v402 = vsel %vm377, %v400, %v401
    %v403 = vrot.slane %v228, 7
    %v404 = vrot.slane %v403, 2
    %v405 = vrot.slane %v239, 7
    %v406 = vsel %vm377, %v404, %v405
    %v407 = vrot.slane %v405, 2
    %v408 = vrot.slane %v240, 7
    %v409 = vsel %vm377, %v407, %v408
    %v410 = vrot.slane %v408, 2
    %v411 = vrot.slane %v241, 7
    %v412 = vsel %vm377, %v410, %v411
    %v413 = vrot.slane %v411, 2
    %v414 = vrot.slane %v220, 7
    %v415 = vsel %vm377, %v413, %v414
    %v416 = vrot.slane %v414, 2
    %v417 = vrot.slane %v242, 7
    %v418 = vsel %vm377, %v416, %v417
    %v419 = vrot.slane %v417, 2
    %v420 = vrot.slane %v243, 7
    %v421 = vsel %vm377, %v419, %v420
    %v422 = vrot.slane %v420, 2
    %v423 = vrot.slane %v244, 7
    %v424 = vsel %vm377, %v422, %v423
    %v425 = vrot.slane %v423, 2
    %v426 = vrot.slane %v230, 7
    %v427 = vsel %vm377, %v425, %v426
    %v444 = vsel %vm257, %v381, -inf
    %v445 = vrot.slane %v444, 4
    %v446 = vmax.f32 %v444, %v445
    %v447 = vrot.slane %v446, 2
    %v448 = vmax.f32 %v446, %v447
    %v449 = vrot.slane %v448, 1
    %v450 = vmax.f32 %v448, %v449
    %v451 = vsel %vm257, %v384, -inf
    %v452 = vrot.slane %v451, 4
    %v453 = vmax.f32 %v451, %v452
    %v454 = vrot.slane %v453, 2
    %v455 = vmax.f32 %v453, %v454
    %v456 = vrot.slane %v455, 1
    %v457 = vmax.f32 %v455, %v456
    %v458 = vsel %vm257, %v387, -inf
    %v459 = vrot.slane %v458, 4
    %v460 = vmax.f32 %v458, %v459
    %v461 = vrot.slane %v460, 2
    %v462 = vmax.f32 %v460, %v461
    %v463 = vrot.slane %v462, 1
    %v464 = vmax.f32 %v462, %v463
    %v465 = vsel %vm257, %v390, -inf
    %v466 = vrot.slane %v465, 4
    %v467 = vmax.f32 %v465, %v466
    %v468 = vrot.slane %v467, 2
    %v469 = vmax.f32 %v467, %v468
    %v470 = vrot.slane %v469, 1
    %v471 = vmax.f32 %v469, %v470
    %v472 = vsel %vm257, %v393, -inf
    %v473 = vrot.slane %v472, 4
    %v474 = vmax.f32 %v472, %v473
    %v475 = vrot.slane %v474, 2
    %v476 = vmax.f32 %v474, %v475
    %v477 = vrot.slane %v476, 1
    %v478 = vmax.f32 %v476, %v477
    %v479 = vsel %vm257, %v396, -inf
    %v480 = vrot.slane %v479, 4
    %v481 = vmax.f32 %v479, %v480
    %v482 = vrot.slane %v481, 2
    %v483 = vmax.f32 %v481, %v482
    %v484 = vrot.slane %v483, 1
    %v485 = vmax.f32 %v483, %v484
    %v486 = vsel %vm257, %v399, -inf
    %v487 = vrot.slane %v486, 4
    %v488 = vmax.f32 %v486, %v487
    %v489 = vrot.slane %v488, 2
    %v490 = vmax.f32 %v488, %v489
    %v491 = vrot.slane %v490, 1
    %v492 = vmax.f32 %v490, %v491
    %v493 = vsel %vm257, %v402, -inf
    %v494 = vrot.slane %v493, 4
    %v495 = vmax.f32 %v493, %v494
    %v496 = vrot.slane %v495, 2
    %v497 = vmax.f32 %v495, %v496
    %v498 = vrot.slane %v497, 1
    %v499 = vmax.f32 %v497, %v498
    %v500 = vsel %vm257, %v406, -inf
    %v501 = vrot.slane %v500, 4
    %v502 = vmax.f32 %v500, %v501
    %v503 = vrot.slane %v502, 2
    %v504 = vmax.f32 %v502, %v503
    %v505 = vrot.slane %v504, 1
    %v506 = vmax.f32 %v504, %v505
    %v507 = vsel %vm257, %v409, -inf
    %v508 = vrot.slane %v507, 4
    %v509 = vmax.f32 %v507, %v508
    %v510 = vrot.slane %v509, 2
    %v511 = vmax.f32 %v509, %v510
    %v512 = vrot.slane %v511, 1
    %v513 = vmax.f32 %v511, %v512
    %v514 = vsel %vm257, %v412, -inf
    %v515 = vrot.slane %v514, 4
    %v516 = vmax.f32 %v514, %v515
    %v517 = vrot.slane %v516, 2
    %v518 = vmax.f32 %v516, %v517
    %v519 = vrot.slane %v518, 1
    %v520 = vmax.f32 %v518, %v519
    %v521 = vsel %vm257, %v415, -inf
    %v522 = vrot.slane %v521, 4
    %v523 = vmax.f32 %v521, %v522
    %v524 = vrot.slane %v523, 2
    %v525 = vmax.f32 %v523, %v524
    %v526 = vrot.slane %v525, 1
    %v527 = vmax.f32 %v525, %v526
    %v528 = vsel %vm257, %v418, -inf
    %v529 = vrot.slane %v528, 4
    %v530 = vmax.f32 %v528, %v529
    %v531 = vrot.slane %v530, 2
    %v532 = vmax.f32 %v530, %v531
    %v533 = vrot.slane %v532, 1
    %v534 = vmax.f32 %v532, %v533
    %v535 = vsel %vm257, %v421, -inf
    %v536 = vrot.slane %v535, 4
    %v537 = vmax.f32 %v535, %v536
    %v538 = vrot.slane %v537, 2
    %v539 = vmax.f32 %v537, %v538
    %v540 = vrot.slane %v539, 1
    %v541 = vmax.f32 %v539, %v540
    %v542 = vsel %vm257, %v424, -inf
    %v543 = vrot.slane %v542, 4
    %v544 = vmax.f32 %v542, %v543
    %v545 = vrot.slane %v544, 2
    %v546 = vmax.f32 %v544, %v545
    %v547 = vrot.slane %v546, 1
    %v548 = vmax.f32 %v546, %v547
    %v549 = vsel %vm257, %v427, -inf
    %v550 = vrot.slane %v549, 4
    %v551 = vmax.f32 %v549, %v550
    %v552 = vrot.slane %v551, 2
    %v553 = vmax.f32 %v551, %v552
    %v554 = vrot.slane %v553, 1
    %v555 = vmax.f32 %v553, %v554
    %v556 = vmax.f32 %v264, %v450
    %v557 = vmax.f32 %v271, %v457
    %v558 = vmax.f32 %v278, %v464
    %v559 = vmax.f32 %v285, %v471
    %v560 = vmax.f32 %v292, %v478
    %v561 = vmax.f32 %v299, %v485
    %v562 = vmax.f32 %v306, %v492
    %v563 = vmax.f32 %v313, %v499
    %v564 = vmax.f32 %v320, %v506
    %v565 = vmax.f32 %v327, %v513
    %v566 = vmax.f32 %v334, %v520
    %v567 = vmax.f32 %v341, %v527
    %v568 = vmax.f32 %v348, %v534
    %v569 = vmax.f32 %v355, %v541
    %v570 = vmax.f32 %v362, %v548
    %v571 = vmax.f32 %v369, %v555
    %vm588 = vcmask 1041409
    %v589 = vsel %vm588, %v557, %v556
    %v590 = vsel %vm372, %v558, %v589
    %vm591 = vcmask 1043459
    %v592 = vsel %vm591, %v559, %v590
    %v593 = vsel %vm374, %v560, %v592
    %vm594 = vcmask 1045509
    %v595 = vsel %vm594, %v561, %v593
    %v596 = vsel %vm376, %v562, %v595
    %vm597 = vcmask 1047559
    %v598 = vsel %vm597, %v563, %v596
    %v599 = vsel %vm588, %v565, %v564
    %v600 = vsel %vm372, %v566, %v599
    %v601 = vsel %vm591, %v567, %v600
    %v602 = vsel %vm374, %v568, %v601
    %v603 = vsel %vm594, %v569, %v602
    %v604 = vsel %vm376, %v570, %v603
    %v605 = vsel %vm597, %v571, %v604
    %608 = vst [vmem:[#allocation7] sm:$0xff] %v598
    %609 = vst [vmem:[#allocation7 + $0x8] sm:$0xff] %v605
    // Predicated region
    $region18: #{tpu_custom_call.1} parent=1 // pred_check
      _
    $region19: #{tpu_custom_call.1} parent=1 // pred_check_branch
      %611 = sbr.rel (0) target = $region21
    $region20: #{tpu_custom_call.1} parent=1 // pred_region
      %613 = vsyncadd [#allocation4], 0
      %s614 = sshll.u32 [#allocation7], 4
      %s615 = int_to_ptr.vmem [resolvable:$true] %s614
      %s616 = sshll.u32 %s2, 4
      %s617 = int_to_ptr.hbm [resolvable:$true] %s616
      %622 = dma.vmem_to_hbm [thread:$0]  %s615, 256, %s617, [#allocation4], 128, 128, 8
    $region21: #{tpu_custom_call.1} parent=1 // pred_fallthru
      _
    // Predicated region
    $region22: #{tpu_custom_call.1} parent=1 // pred_check
      _
    $region23: #{tpu_custom_call.1} parent=1 // pred_check_branch
      %624 = sbr.rel (0) target = $region25
    $region24: #{tpu_custom_call.1} parent=1 // pred_region
      %626 = dma.done [#allocation4], 256
    $region25: #{tpu_custom_call.1} parent=1 // pred_fallthru
      _
    %627 = vsyncpa [#allocation3], 1
    %628 = vsyncpa [#allocation6], 1
    %629 = vsyncpa [#allocation4], 1

</llo_original>
